<compile_context>
chip_gen: v6e
topology: v6e:2x2x1
jax: 0.10.0
libtpu: 0.0.40
codegen_flags: <defaults>
</compile_context>

<pallas_src>
import jax
import jax.numpy as jnp
import numpy as np
from jax.experimental import pallas as pl
from jax.experimental.pallas import tpu as pltpu

D_IN, D_H, D_OUT = 3, 48, 4


def _mlp_kernel(x_ref, w1_ref, b1_ref, w2_ref, b2_ref, w3_ref, b3_ref, o_ref):
    # x_ref : (3,  T)   batch on lanes
    # w1    : (48, 3), b1: (48, 1)
    # w2    : (48, 48), b2: (48, 1)
    # w3    : (4,  48), b3: (4, 1)
    # o_ref : (4,  T)
    xT = x_ref[...]
    w1 = w1_ref[...]

    # Layer 1: K=3 contraction on the VPU as broadcast FMAs, bias folded into
    # the first FMA.  (48,1) * (1,T) broadcasts (stride-0) to (48,T).
    acc = w1[:, 0:1] * xT[0:1, :] + b1_ref[...]
    acc = acc + w1[:, 1:2] * xT[1:2, :]
    acc = acc + w1[:, 2:3] * xT[2:3, :]
    h = jnp.tanh(acc)
    # Dropout(0.05): identity in eval mode.

    # Layer 2: (48,48) @ (48,T) -> (48,T), MXU N-dim = batch.
    h = jnp.tanh(
        jnp.dot(w2_ref[...], h, preferred_element_type=jnp.float32) + b2_ref[...]
    )
    # Dropout(0.05): identity in eval mode.

    # Layer 3: (4,48) @ (48,T) -> (4,T); lane-dense output store.
    out = jnp.dot(w3_ref[...], h, preferred_element_type=jnp.float32) + b3_ref[...]
    o_ref[...] = out.astype(o_ref.dtype)


def _pick_tile(B, batch_tile):
    """Round tile to a multiple of 128 and cap it so the grid has >= 2 steps
    (v7x megacore) whenever the 128-padded batch allows it."""
    batch_tile = max(128, (batch_tile // 128) * 128)
    b_pad128 = pl.cdiv(B, 128) * 128
    half = ((b_pad128 // 2) // 128) * 128
    if half >= 128:
        batch_tile = min(batch_tile, half)
    return batch_tile


def energy_model_forward_t(xT, params, *, batch_tile=4096):
    """Feature-major entry point: xT (3, B) float32 -> (4, B) float32.

    No wrapper-side transposes; use this when the surrounding model can plumb
    the (feature, batch) layout through. Any B works (tail tile zero-padded).
    """
    w1, b1, w2, b2, w3, b3 = params  # weights (out, in); biases (out, 1)
    B = xT.shape[1]
    batch_tile = _pick_tile(B, batch_tile)
    n_tiles = pl.cdiv(B, batch_tile)
    B_pad = n_tiles * batch_tile
    if B_pad != B:
        xT = jnp.pad(xT, ((0, 0), (0, B_pad - B)))

    full = lambda shape: pl.BlockSpec(shape, lambda i: (0, 0))

    n_params_bytes = 4 * (D_H * D_IN + D_H + D_H * D_H + D_H + D_OUT * D_H + D_OUT)
    cost = pl.CostEstimate(
        flops=2 * (D_IN * D_H + D_H * D_H + D_H * D_OUT) * B_pad,
        transcendentals=2 * D_H * B_pad,
        bytes_accessed=4 * (D_IN + D_OUT) * B_pad + n_params_bytes,
    )

    outT = pl.pallas_call(
        _mlp_kernel,
        out_shape=jax.ShapeDtypeStruct((D_OUT, B_pad), jnp.float32),
        grid_spec=pltpu.PrefetchScalarGridSpec(
            num_scalar_prefetch=0,
            grid=(n_tiles,),
            in_specs=[
                pl.BlockSpec((D_IN, batch_tile), lambda i: (0, i)),
                full((D_H, D_IN)),
                full((D_H, 1)),
                full((D_H, D_H)),
                full((D_H, 1)),
                full((D_OUT, D_H)),
                full((D_OUT, 1)),
            ],
            out_specs=pl.BlockSpec((D_OUT, batch_tile), lambda i: (0, i)),
        ),
        compiler_params=pltpu.CompilerParams(
            dimension_semantics=("parallel",),
        ),
        cost_estimate=cost,
    )(xT, w1, b1, w2, b2, w3, b3)

    if B_pad != B:
        outT = outT[:, :B]
    return outT


def energy_model_forward(x, params, *, batch_tile=4096):
    """Batch-major convenience wrapper: x (B, 3) float32 -> (B, 4) float32.

    Costs one transpose pass on each side of the kernel; prefer
    energy_model_forward_t when the caller can provide (feature, batch).
    """
    return energy_model_forward_t(x.T, params, batch_tile=batch_tile).T


def init_params(key):
    """PyTorch-style Linear init: weight (out, in) and bias (out, 1), both
    drawn from U(-1/sqrt(fan_in), 1/sqrt(fan_in))."""
    ks = jax.random.split(key, 6)

    def linear(kw, kb, fan_in, fan_out):
        bound = 1.0 / np.sqrt(fan_in)
        w = jax.random.uniform(kw, (fan_out, fan_in), jnp.float32, -bound, bound)
        b = jax.random.uniform(kb, (fan_out, 1), jnp.float32, -bound, bound)
        return w, b

    w1, b1 = linear(ks[0], ks[1], D_IN, D_H)
    w2, b2 = linear(ks[2], ks[3], D_H, D_H)
    w3, b3 = linear(ks[4], ks[5], D_H, D_OUT)
    return (w1, b1, w2, b2, w3, b3)


def reference_forward(x, params):
    w1, b1, w2, b2, w3, b3 = params
    h = jnp.tanh(x @ w1.T + b1[:, 0])
    h = jnp.tanh(h @ w2.T + b2[:, 0])
    return h @ w3.T + b3[:, 0]


if __name__ == "__main__":
    key = jax.random.PRNGKey(0)
    k_params, k_x = jax.random.split(key)
    params = init_params(k_params)

    # B=200: the megacore cap reduces the tile to 128, exercising a 2-step
    # "parallel" grid AND a zero-padded tail tile. Production uses the large
    # default tile (2048-8192) automatically for large B.
    B = 200
    x = jax.random.normal(k_x, (B, D_IN), jnp.float32)

    out = energy_model_forward(x, params)  # default batch_tile; capped to 128 here
    out = jax.block_until_ready(out)
    ref = reference_forward(x, params)
    np.testing.assert_allclose(np.asarray(out), np.asarray(ref), rtol=2e-5, atol=2e-5)

    # Also exercise the transpose-free, exactly-divisible fast path.
    B2 = 256
    x2 = jax.random.normal(jax.random.PRNGKey(1), (B2, D_IN), jnp.float32)
    out2 = jax.block_until_ready(energy_model_forward_t(x2.T, params)).T
    ref2 = reference_forward(x2, params)
    np.testing.assert_allclose(np.asarray(out2), np.asarray(ref2), rtol=2e-5, atol=2e-5)

    print("KERNEL_OK")
</pallas_src>

<mosaic_0001>
module attributes {stable_mosaic.version = 11 : i64} {
  func.func @_mlp_kernel(%arg0: i32, %arg1: memref<3x128xf32, #tpu.memory_space<vmem>>, %arg2: memref<48x3xf32, #tpu.memory_space<vmem>>, %arg3: memref<48x1xf32, #tpu.memory_space<vmem>>, %arg4: memref<48x48xf32, #tpu.memory_space<vmem>>, %arg5: memref<48x1xf32, #tpu.memory_space<vmem>>, %arg6: memref<4x48xf32, #tpu.memory_space<vmem>>, %arg7: memref<4x1xf32, #tpu.memory_space<vmem>>, %arg8: memref<4x128xf32, #tpu.memory_space<vmem>>) attributes {dimension_semantics = [#tpu.dimension_semantics<parallel>], iteration_bounds = array<i64: 2>, scalar_prefetch = 0 : i64, scratch_operands = 0 : i64, tpu.core_type = #tpu.core_type<tc>, window_params = [{transform_indices = @transform_0, window_bounds = array<i64: 3, 128>}, {pipeline_mode = #tpu.pipeline_mode<synchronous>, transform_indices = @transform_1, window_bounds = array<i64: 48, 3>}, {pipeline_mode = #tpu.pipeline_mode<synchronous>, transform_indices = @transform_2, window_bounds = array<i64: 48, 1>}, {pipeline_mode = #tpu.pipeline_mode<synchronous>, transform_indices = @transform_3, window_bounds = array<i64: 48, 48>}, {pipeline_mode = #tpu.pipeline_mode<synchronous>, transform_indices = @transform_4, window_bounds = array<i64: 48, 1>}, {pipeline_mode = #tpu.pipeline_mode<synchronous>, transform_indices = @transform_5, window_bounds = array<i64: 4, 48>}, {pipeline_mode = #tpu.pipeline_mode<synchronous>, transform_indices = @transform_6, window_bounds = array<i64: 4, 1>}, {transform_indices = @transform_7, window_bounds = array<i64: 4, 128>}]} {
    %c0 = arith.constant 0 : index
    %c0_0 = arith.constant 0 : index
    %0 = vector.load %arg1[%c0, %c0_0] : memref<3x128xf32, #tpu.memory_space<vmem>>, vector<3x128xf32>
    %c0_1 = arith.constant 0 : index
    %c0_2 = arith.constant 0 : index
    %1 = vector.load %arg2[%c0_1, %c0_2] : memref<48x3xf32, #tpu.memory_space<vmem>>, vector<48x3xf32>
    %2 = vector.extract_strided_slice %1 {offsets = [0, 0], sizes = [48, 1], strides = [1, 1]} : vector<48x3xf32> to vector<48x1xf32>
    %3 = vector.extract_strided_slice %0 {offsets = [0, 0], sizes = [1, 128], strides = [1, 1]} : vector<3x128xf32> to vector<1x128xf32>
    %4 = vector.broadcast %2 : vector<48x1xf32> to vector<48x128xf32>
    %5 = vector.broadcast %3 : vector<1x128xf32> to vector<48x128xf32>
    %6 = arith.mulf %4, %5 : vector<48x128xf32>
    %c0_3 = arith.constant 0 : index
    %c0_4 = arith.constant 0 : index
    %7 = vector.load %arg3[%c0_3, %c0_4] : memref<48x1xf32, #tpu.memory_space<vmem>>, vector<48x1xf32>
    %8 = vector.broadcast %7 : vector<48x1xf32> to vector<48x128xf32>
    %9 = arith.addf %6, %8 : vector<48x128xf32>
    %10 = vector.extract_strided_slice %1 {offsets = [0, 1], sizes = [48, 1], strides = [1, 1]} : vector<48x3xf32> to vector<48x1xf32>
    %11 = vector.extract_strided_slice %0 {offsets = [1, 0], sizes = [1, 128], strides = [1, 1]} : vector<3x128xf32> to vector<1x128xf32>
    %12 = vector.broadcast %10 : vector<48x1xf32> to vector<48x128xf32>
    %13 = vector.broadcast %11 : vector<1x128xf32> to vector<48x128xf32>
    %14 = arith.mulf %12, %13 : vector<48x128xf32>
    %15 = arith.addf %9, %14 : vector<48x128xf32>
    %16 = vector.extract_strided_slice %1 {offsets = [0, 2], sizes = [48, 1], strides = [1, 1]} : vector<48x3xf32> to vector<48x1xf32>
    %17 = vector.extract_strided_slice %0 {offsets = [2, 0], sizes = [1, 128], strides = [1, 1]} : vector<3x128xf32> to vector<1x128xf32>
    %18 = vector.broadcast %16 : vector<48x1xf32> to vector<48x128xf32>
    %19 = vector.broadcast %17 : vector<1x128xf32> to vector<48x128xf32>
    %20 = arith.mulf %18, %19 : vector<48x128xf32>
    %21 = arith.addf %15, %20 : vector<48x128xf32>
    %22 = math.tanh %21 : vector<48x128xf32>
    %c0_5 = arith.constant 0 : index
    %c0_6 = arith.constant 0 : index
    %23 = vector.load %arg4[%c0_5, %c0_6] : memref<48x48xf32, #tpu.memory_space<vmem>>, vector<48x48xf32>
    %cst = arith.constant dense<0.000000e+00> : vector<48x128xf32>
    %24 = tpu.matmul %23, %22, %cst {dimension_numbers = #tpu.dot_dimension_numbers<[1], [0], [0], [1], [0, 0, 1, 1], [], []>} : vector<48x48xf32>, vector<48x128xf32>, vector<48x128xf32> -> vector<48x128xf32>
    %c0_7 = arith.constant 0 : index
    %c0_8 = arith.constant 0 : index
    %25 = vector.load %arg5[%c0_7, %c0_8] : memref<48x1xf32, #tpu.memory_space<vmem>>, vector<48x1xf32>
    %26 = vector.broadcast %25 : vector<48x1xf32> to vector<48x128xf32>
    %27 = arith.addf %24, %26 : vector<48x128xf32>
    %28 = math.tanh %27 : vector<48x128xf32>
    %c0_9 = arith.constant 0 : index
    %c0_10 = arith.constant 0 : index
    %29 = vector.load %arg6[%c0_9, %c0_10] : memref<4x48xf32, #tpu.memory_space<vmem>>, vector<4x48xf32>
    %cst_11 = arith.constant dense<0.000000e+00> : vector<4x128xf32>
    %30 = tpu.matmul %29, %28, %cst_11 {dimension_numbers = #tpu.dot_dimension_numbers<[1], [0], [0], [1], [0, 0, 1, 1], [], []>} : vector<4x48xf32>, vector<48x128xf32>, vector<4x128xf32> -> vector<4x128xf32>
    %c0_12 = arith.constant 0 : index
    %c0_13 = arith.constant 0 : index
    %31 = vector.load %arg7[%c0_12, %c0_13] : memref<4x1xf32, #tpu.memory_space<vmem>>, vector<4x1xf32>
    %32 = vector.broadcast %31 : vector<4x1xf32> to vector<4x128xf32>
    %33 = arith.addf %30, %32 : vector<4x128xf32>
    %c0_14 = arith.constant 0 : index
    %c0_15 = arith.constant 0 : index
    %34 = vector.load %arg8[%c0_14, %c0_15] : memref<4x128xf32, #tpu.memory_space<vmem>>, vector<4x128xf32>
    tpu.vector_store %arg8[%c0_14, %c0_15], %33 {strides = array<i32>} : memref<4x128xf32, #tpu.memory_space<vmem>>, vector<4x128xf32>,
    return
  }
  func.func @transform_0(%arg0: i32) -> (i32, i32) {
    %c0_i32 = arith.constant 0 : i32
    %c0_i32_0 = arith.constant 0 : i32
    return %c0_i32, %arg0 : i32, i32
  }
  func.func @transform_1(%arg0: i32) -> (i32, i32) {
    %c0_i32 = arith.constant 0 : i32
    %c0_i32_0 = arith.constant 0 : i32
    %c0_i32_1 = arith.constant 0 : i32
    return %c0_i32, %c0_i32_0 : i32, i32
  }
  func.func @transform_2(%arg0: i32) -> (i32, i32) {
    %c0_i32 = arith.constant 0 : i32
    %c0_i32_0 = arith.constant 0 : i32
    %c0_i32_1 = arith.constant 0 : i32
    return %c0_i32, %c0_i32_0 : i32, i32
  }
  func.func @transform_3(%arg0: i32) -> (i32, i32) {
    %c0_i32 = arith.constant 0 : i32
    %c0_i32_0 = arith.constant 0 : i32
    %c0_i32_1 = arith.constant 0 : i32
    return %c0_i32, %c0_i32_0 : i32, i32
  }
  func.func @transform_4(%arg0: i32) -> (i32, i32) {
    %c0_i32 = arith.constant 0 : i32
    %c0_i32_0 = arith.constant 0 : i32
    %c0_i32_1 = arith.constant 0 : i32
    return %c0_i32, %c0_i32_0 : i32, i32
  }
  func.func @transform_5(%arg0: i32) -> (i32, i32) {
    %c0_i32 = arith.constant 0 : i32
    %c0_i32_0 = arith.constant 0 : i32
    %c0_i32_1 = arith.constant 0 : i32
    return %c0_i32, %c0_i32_0 : i32, i32
  }
  func.func @transform_6(%arg0: i32) -> (i32, i32) {
    %c0_i32 = arith.constant 0 : i32
    %c0_i32_0 = arith.constant 0 : i32
    %c0_i32_1 = arith.constant 0 : i32
    return %c0_i32, %c0_i32_0 : i32, i32
  }
  func.func @transform_7(%arg0: i32) -> (i32, i32) {
    %c0_i32 = arith.constant 0 : i32
    %c0_i32_0 = arith.constant 0 : i32
    return %c0_i32, %arg0 : i32, i32
  }
}

</mosaic_0001>

<llo_original>
// kernel: tpu_custom_call.1
$region0: #{tpu_custom_call.1}
  #allocation0 [shape = 'u32[]', space=smem, size = 0x4, offset = 0x4, fixed_abs, tag = 'smem constant byte address 0x4 - core index']
  #allocation1 [shape = 'u32[144,128]{1,0:T(1,128)}', space=vmem, size = 0x12000, scoped, tag = 'internal scratch']
  %s0 = inlined_call_operand.vmem [shape: f32[3,256], index: 0, kind: input, shape index: {}]
  %s1 = inlined_call_operand.vmem [shape: f32[48,3], index: 1, kind: input, shape index: {}]
  %s2 = inlined_call_operand.vmem [shape: f32[48,1], index: 2, kind: input, shape index: {}]
  %s3 = inlined_call_operand.vmem [shape: f32[48,48], index: 3, kind: input, shape index: {}]
  %s4 = inlined_call_operand.vmem [shape: f32[48,1], index: 4, kind: input, shape index: {}]
  %s5 = inlined_call_operand.vmem [shape: f32[4,48], index: 5, kind: input, shape index: {}]
  %s6 = inlined_call_operand.vmem [shape: f32[4,1], index: 6, kind: input, shape index: {}]
  %s7 = inlined_call_operand.hbm [shape: f32[4,256], index: 7, kind: output, shape index: {}]
  %s8 = sld [smem:[#allocation0]]
  $region61: #{tpu_custom_call.1} parent=0
    _
  %s10 = ssub.s32 1, %s8
  %s11 = scalar_select 0, %s10, %s8
  $region1: #{tpu_custom_call.1} parent=0
    #allocation2 [shape = 'u8[4096]{0}', space=vmem, size = 0x1000, scoped, tag = 'output window, operand 0']
    #allocation3 [shape = 's32[2]{0}', space=sflag, size = 0x8, scoped, tag = 'scoped memory for tpu_custom_call.1']
    %12 = vsyncpa [#allocation3], 0
    %s13 = scalar_lea.sflag [#allocation3], 1
    %14 = vsyncpa %s13, 0
    loop: start=0, step=1, limit=4
    $region2: #{tpu_custom_call.1} parent=1 // loop_pre_header
      _
    $region3: #{tpu_custom_call.1} parent=1 // loop_header
      %s16 = sphi 0, %s20
      %p17 = scmp.ge.s32.totalorder %s16, 4
      %s26 = sphi 0, %s28
      %s29 = sphi 0, %s26
      %s30 = sphi 0, %s29
      %s46 = sphi 0, %s30
      %s50 = sphi 0, %s50
      %s52 = sphi 0, %s50
      %s53 = sphi 0, %s52
      %s67 = sphi 0, %s53
      %s71 = sphi 0, %s71
      %s73 = sphi 0, %s71
      %s74 = sphi 0, %s73
      %s88 = sphi 0, %s74
      %s92 = sphi 0, %s92
      %s94 = sphi 0, %s92
      %s95 = sphi 0, %s94
      %s109 = sphi 0, %s95
      %s113 = sphi 0, %s113
      %s115 = sphi 0, %s113
      %s116 = sphi 0, %s115
      %s130 = sphi 0, %s116
      %s134 = sphi 0, %s134
      %s136 = sphi 0, %s134
      %s137 = sphi 0, %s136
      %s151 = sphi 0, %s137
      %s155 = sphi 0, %s155
      %s157 = sphi 0, %s155
      %s158 = sphi 0, %s157
      %s172 = sphi 0, %s158
      %s178 = sphi 0, %s180
      %s181 = sphi 0, %s178
      %s182 = sphi 0, %s181
      %s198 = sphi 0, %s182
    $region4: #{tpu_custom_call.1} parent=1 // loop_header_branch
      %19 = sbr.rel (%p17) target = $region8
    $region5: #{tpu_custom_call.1} parent=1 // loop_body
      %s21 = ssub.s32 %s16, 1
      %s22 = ssub.s32 %s16, 2
      %s23 = sadd.s32 %s16, 1
      %s24 = ssub.s32 %s16, %s23
      %p25 = scmp.eq.s32.totalorder %s24, 0
      %s27 = sadd.s32 %s26, 1
      %s28 = scalar_select %p25, %s26, %s27
      %p31 = pneg %p25
      %p32 = scmp.eq.s32.totalorder %s16, 1
      %p33 = por %p31, %p32
      %p34 = scmp.ne.s32.totalorder %s26, %s29
      %p35 = scmp.eq.s32.totalorder %s16, 0
      %p36 = por %p34, %p35
      %p37 = scmp.ne.s32.totalorder %s26, %s29
      %p38 = scmp.eq.s32.totalorder %s21, 1
      %p39 = por %p37, %p38
      %p40 = scmp.ne.s32.totalorder %s29, %s30
      %p41 = scmp.eq.s32.totalorder %s21, 0
      %p42 = por %p40, %p41
      %p43 = scmp.ne.s32.totalorder %s29, %s30
      %p44 = scmp.eq.s32.totalorder %s22, 1
      %p45 = por %p43, %p44
      %p47 = scmp.ne.s32.totalorder %s30, %s46
      %p48 = scmp.eq.s32.totalorder %s22, 0
      %p49 = por %p47, %p48
      %s51 = sadd.s32 %s50, 1
      %p54 = scmp.eq.s32.totalorder %s16, 1
      %p55 = scmp.ne.s32.totalorder %s50, %s52
      %p56 = scmp.eq.s32.totalorder %s16, 0
      %p57 = por %p55, %p56
      %p58 = scmp.ne.s32.totalorder %s50, %s52
      %p59 = scmp.eq.s32.totalorder %s21, 1
      %p60 = por %p58, %p59
      %p61 = scmp.ne.s32.totalorder %s52, %s53
      %p62 = scmp.eq.s32.totalorder %s21, 0
      %p63 = por %p61, %p62
      %p64 = scmp.ne.s32.totalorder %s52, %s53
      %p65 = scmp.eq.s32.totalorder %s22, 1
      %p66 = por %p64, %p65
      %p68 = scmp.ne.s32.totalorder %s53, %s67
      %p69 = scmp.eq.s32.totalorder %s22, 0
      %p70 = por %p68, %p69
      %s72 = sadd.s32 %s71, 1
      %p75 = scmp.eq.s32.totalorder %s16, 1
      %p76 = scmp.ne.s32.totalorder %s71, %s73
      %p77 = scmp.eq.s32.totalorder %s16, 0
      %p78 = por %p76, %p77
      %p79 = scmp.ne.s32.totalorder %s71, %s73
      %p80 = scmp.eq.s32.totalorder %s21, 1
      %p81 = por %p79, %p80
      %p82 = scmp.ne.s32.totalorder %s73, %s74
      %p83 = scmp.eq.s32.totalorder %s21, 0
      %p84 = por %p82, %p83
      %p85 = scmp.ne.s32.totalorder %s73, %s74
      %p86 = scmp.eq.s32.totalorder %s22, 1
      %p87 = por %p85, %p86
      %p89 = scmp.ne.s32.totalorder %s74, %s88
      %p90 = scmp.eq.s32.totalorder %s22, 0
      %p91 = por %p89, %p90
      %s93 = sadd.s32 %s92, 1
      %p96 = scmp.eq.s32.totalorder %s16, 1
      %p97 = scmp.ne.s32.totalorder %s92, %s94
      %p98 = scmp.eq.s32.totalorder %s16, 0
      %p99 = por %p97, %p98
      %p100 = scmp.ne.s32.totalorder %s92, %s94
      %p101 = scmp.eq.s32.totalorder %s21, 1
      %p102 = por %p100, %p101
      %p103 = scmp.ne.s32.totalorder %s94, %s95
      %p104 = scmp.eq.s32.totalorder %s21, 0
      %p105 = por %p103, %p104
      %p106 = scmp.ne.s32.totalorder %s94, %s95
      %p107 = scmp.eq.s32.totalorder %s22, 1
      %p108 = por %p106, %p107
      %p110 = scmp.ne.s32.totalorder %s95, %s109
      %p111 = scmp.eq.s32.totalorder %s22, 0
      %p112 = por %p110, %p111
      %s114 = sadd.s32 %s113, 1
      %p117 = scmp.eq.s32.totalorder %s16, 1
      %p118 = scmp.ne.s32.totalorder %s113, %s115
      %p119 = scmp.eq.s32.totalorder %s16, 0
      %p120 = por %p118, %p119
      %p121 = scmp.ne.s32.totalorder %s113, %s115
      %p122 = scmp.eq.s32.totalorder %s21, 1
      %p123 = por %p121, %p122
      %p124 = scmp.ne.s32.totalorder %s115, %s116
      %p125 = scmp.eq.s32.totalorder %s21, 0
      %p126 = por %p124, %p125
      %p127 = scmp.ne.s32.totalorder %s115, %s116
      %p128 = scmp.eq.s32.totalorder %s22, 1
      %p129 = por %p127, %p128
      %p131 = scmp.ne.s32.totalorder %s116, %s130
      %p132 = scmp.eq.s32.totalorder %s22, 0
      %p133 = por %p131, %p132
      %s135 = sadd.s32 %s134, 1
      %p138 = scmp.eq.s32.totalorder %s16, 1
      %p139 = scmp.ne.s32.totalorder %s134, %s136
      %p140 = scmp.eq.s32.totalorder %s16, 0
      %p141 = por %p139, %p140
      %p142 = scmp.ne.s32.totalorder %s134, %s136
      %p143 = scmp.eq.s32.totalorder %s21, 1
      %p144 = por %p142, %p143
      %p145 = scmp.ne.s32.totalorder %s136, %s137
      %p146 = scmp.eq.s32.totalorder %s21, 0
      %p147 = por %p145, %p146
      %p148 = scmp.ne.s32.totalorder %s136, %s137
      %p149 = scmp.eq.s32.totalorder %s22, 1
      %p150 = por %p148, %p149
      %p152 = scmp.ne.s32.totalorder %s137, %s151
      %p153 = scmp.eq.s32.totalorder %s22, 0
      %p154 = por %p152, %p153
      %s156 = sadd.s32 %s155, 1
      %p159 = scmp.eq.s32.totalorder %s16, 1
      %p160 = scmp.ne.s32.totalorder %s155, %s157
      %p161 = scmp.eq.s32.totalorder %s16, 0
      %p162 = por %p160, %p161
      %p163 = scmp.ne.s32.totalorder %s155, %s157
      %p164 = scmp.eq.s32.totalorder %s21, 1
      %p165 = por %p163, %p164
      %p166 = scmp.ne.s32.totalorder %s157, %s158
      %p167 = scmp.eq.s32.totalorder %s21, 0
      %p168 = por %p166, %p167
      %p169 = scmp.ne.s32.totalorder %s157, %s158
      %p170 = scmp.eq.s32.totalorder %s22, 1
      %p171 = por %p169, %p170
      %p173 = scmp.ne.s32.totalorder %s158, %s172
      %p174 = scmp.eq.s32.totalorder %s22, 0
      %p175 = por %p173, %p174
      %s176 = ssub.s32 %s16, %s23
      %p177 = scmp.eq.s32.totalorder %s176, 0
      %s179 = sadd.s32 %s178, 1
      %s180 = scalar_select %p177, %s178, %s179
      %p183 = pneg %p177
      %p184 = scmp.eq.s32.totalorder %s16, 1
      %p185 = por %p183, %p184
      %p186 = scmp.ne.s32.totalorder %s178, %s181
      %p187 = scmp.eq.s32.totalorder %s16, 0
      %p188 = por %p186, %p187
      %p189 = scmp.ne.s32.totalorder %s178, %s181
      %p190 = scmp.eq.s32.totalorder %s21, 1
      %p191 = por %p189, %p190
      %p192 = scmp.ne.s32.totalorder %s181, %s182
      %p193 = scmp.eq.s32.totalorder %s21, 0
      %p194 = por %p192, %p193
      %p195 = scmp.ne.s32.totalorder %s181, %s182
      %p196 = scmp.eq.s32.totalorder %s22, 1
      %p197 = por %p195, %p196
      %p199 = scmp.ne.s32.totalorder %s182, %s198
      %p200 = scmp.eq.s32.totalorder %s22, 0
      %p201 = por %p199, %p200
      %p202 = scmp.le.s32.totalorder 1, %s16
      %p203 = scmp.lt.s32.totalorder %s16, 3
      %p204 = pnand %p202, %p203
      %p205 = pneg %p204
      // Predicated region
      $region9: #{tpu_custom_call.1} parent=5 // pred_check
        _
      $region10: #{tpu_custom_call.1} parent=5 // pred_check_branch
        %207 = sbr.rel (%p204) target = $region12
      $region11: #{tpu_custom_call.1} parent=5 // pred_region
        %s208 = ssub.s32 %s16, 1
        // Predicated region
        $region13: #{tpu_custom_call.1} parent=11 // pred_check
          %p209 = pneg %p63
        $region14: #{tpu_custom_call.1} parent=11 // pred_check_branch
          %211 = sbr.rel (%p209) target = $region16
        $region15: #{tpu_custom_call.1} parent=11 // pred_region
          _
        $region16: #{tpu_custom_call.1} parent=11 // pred_fallthru
          _
        // Predicated region
        $region17: #{tpu_custom_call.1} parent=11 // pred_check
          %p212 = pneg %p84
        $region18: #{tpu_custom_call.1} parent=11 // pred_check_branch
          %214 = sbr.rel (%p212) target = $region20
        $region19: #{tpu_custom_call.1} parent=11 // pred_region
          _
        $region20: #{tpu_custom_call.1} parent=11 // pred_fallthru
          _
        // Predicated region
        $region21: #{tpu_custom_call.1} parent=11 // pred_check
          %p215 = pneg %p105
        $region22: #{tpu_custom_call.1} parent=11 // pred_check_branch
          %217 = sbr.rel (%p215) target = $region24
        $region23: #{tpu_custom_call.1} parent=11 // pred_region
          _
        $region24: #{tpu_custom_call.1} parent=11 // pred_fallthru
          _
        // Predicated region
        $region25: #{tpu_custom_call.1} parent=11 // pred_check
          %p218 = pneg %p126
        $region26: #{tpu_custom_call.1} parent=11 // pred_check_branch
          %220 = sbr.rel (%p218) target = $region28
        $region27: #{tpu_custom_call.1} parent=11 // pred_region
          _
        $region28: #{tpu_custom_call.1} parent=11 // pred_fallthru
          _
        // Predicated region
        $region29: #{tpu_custom_call.1} parent=11 // pred_check
          %p221 = pneg %p147
        $region30: #{tpu_custom_call.1} parent=11 // pred_check_branch
          %223 = sbr.rel (%p221) target = $region32
        $region31: #{tpu_custom_call.1} parent=11 // pred_region
          _
        $region32: #{tpu_custom_call.1} parent=11 // pred_fallthru
          _
        // Predicated region
        $region33: #{tpu_custom_call.1} parent=11 // pred_check
          %p224 = pneg %p168
        $region34: #{tpu_custom_call.1} parent=11 // pred_check_branch
          %226 = sbr.rel (%p224) target = $region36
        $region35: #{tpu_custom_call.1} parent=11 // pred_region
          _
        $region36: #{tpu_custom_call.1} parent=11 // pred_fallthru
          _
      $region12: #{tpu_custom_call.1} parent=5 // pred_fallthru
        _
      %p227 = scmp.lt.s32.totalorder %s16, 2
      // Predicated region
      $region37: #{tpu_custom_call.1} parent=5 // pred_check
        %p228 = pneg %p227
      $region38: #{tpu_custom_call.1} parent=5 // pred_check_branch
        %230 = sbr.rel (%p228) target = $region40
      $region39: #{tpu_custom_call.1} parent=5 // pred_region
        // Predicated region
        $region41: #{tpu_custom_call.1} parent=39 // pred_check
          %p231 = pneg %p36
        $region42: #{tpu_custom_call.1} parent=39 // pred_check_branch
          %233 = sbr.rel (%p231) target = $region44
        $region43: #{tpu_custom_call.1} parent=39 // pred_region
          %p234 = scmp.lt.s32.totalorder %s16, 1
          %s235 = scalar_select %p234, %s16, 1
          %s236 = smul.addr %s235, 4
          %s237 = scalar_lea.vmem %s0, %s236
        $region44: #{tpu_custom_call.1} parent=39 // pred_fallthru
          _
      $region40: #{tpu_custom_call.1} parent=5 // pred_fallthru
        _
      %p238 = scmp.le.s32.totalorder 1, %s16
      %p239 = scmp.lt.s32.totalorder %s16, 3
      %p240 = pnand %p238, %p239
      %p241 = pneg %p240
      // Predicated region
      $region45: #{tpu_custom_call.1} parent=5 // pred_check
        _
      $region46: #{tpu_custom_call.1} parent=5 // pred_check_branch
        %243 = sbr.rel (%p240) target = $region48
      $region47: #{tpu_custom_call.1} parent=5 // pred_region
        %s244 = ssub.s32 %s16, 1
        %p245 = scmp.lt.s32.totalorder %s21, 1
        %s246 = scalar_select %p245, %s21, 1
        %s247 = smul.addr %s246, 4
        %s248 = scalar_lea.vmem %s0, %s247
        %p249 = pneg %p42
        %p250 = pneg %p39
        %p251 = pneg %p63
        %p252 = pneg %p60
        %p253 = pneg %p84
        %p254 = pneg %p81
        %p255 = pneg %p105
        %p256 = pneg %p102
        %p257 = pneg %p126
        %p258 = pneg %p123
        %p259 = pneg %p147
        %p260 = pneg %p144
        %p261 = pneg %p168
        %p262 = pneg %p165
        %p263 = pneg %p194
        %p264 = pneg %p191
        %s265 = sand.u32 %s181, 1
        %s266 = scalar_lea.sflag [#allocation3], %s265
        %s267 = sand.u32 %s181, 1
        %s268 = smul.addr %s267, 4
        %s269 = scalar_lea.vmem [#allocation2], %s268
        %p270 = scmp.lt.s32.totalorder %s21, 1
        %s271 = scalar_select %p270, %s21, 1
        %s272 = smul.addr %s271, 4
        %s273 = scalar_lea.vmem %s0, %s272
        %v274 = vld [vmem:[%s273] sm:$0x7]
        %v275 = vld [vmem:[%s1] sm:$0xff]
        %v276 = vld [vmem:[%s1 + $0x8] sm:$0xff]
        %v277 = vld [vmem:[%s1 + $0x10] sm:$0xff]
        %v278 = vld [vmem:[%s1 + $0x18] sm:$0xff]
        %v279 = vld [vmem:[%s1 + $0x20] sm:$0xff]
        %v280 = vld [vmem:[%s1 + $0x28] sm:$0xff]
        %282 = vset.pattern.permute.xlu0 0
        %283 = vperm.xlu0 %282, %v275
        %v284 = vpop.permute.xlu0 %283
        %287 = vset.pattern.permute.xlu0 0
        %288 = vperm.xlu0 %287, %v276
        %v289 = vpop.permute.xlu0 %288
        %292 = vset.pattern.permute.xlu0 0
        %293 = vperm.xlu0 %292, %v277
        %v294 = vpop.permute.xlu0 %293
        %297 = vset.pattern.permute.xlu0 0
        %298 = vperm.xlu0 %297, %v278
        %v299 = vpop.permute.xlu0 %298
        %302 = vset.pattern.permute.xlu0 0
        %303 = vperm.xlu0 %302, %v279
        %v304 = vpop.permute.xlu0 %303
        %307 = vset.pattern.permute.xlu0 0
        %308 = vperm.xlu0 %307, %v280
        %v309 = vpop.permute.xlu0 %308
        %v311 = vlaneseq
        %v312 = vshrl.u32 %v311, 7
        %v313 = vsub.s32 0, %v312
        %v314 = vrot.slane %v274, %v313
        %v315 = vmul.f32 %v284, %v314
        %v316 = vmul.f32 %v289, %v314
        %v317 = vmul.f32 %v294, %v314
        %v318 = vmul.f32 %v299, %v314
        %v319 = vmul.f32 %v304, %v314
        %v320 = vmul.f32 %v309, %v314
        %v321 = vld [vmem:[%s2] sm:$0xff]
        %v322 = vld [vmem:[%s2 + $0x8] sm:$0xff]
        %v323 = vld [vmem:[%s2 + $0x10] sm:$0xff]
        %v324 = vld [vmem:[%s2 + $0x18] sm:$0xff]
        %v325 = vld [vmem:[%s2 + $0x20] sm:$0xff]
        %v326 = vld [vmem:[%s2 + $0x28] sm:$0xff]
        %328 = vset.pattern.permute.xlu0 0
        %329 = vperm.xlu0 %328, %v321
        %v330 = vpop.permute.xlu0 %329
        %333 = vset.pattern.permute.xlu0 0
        %334 = vperm.xlu0 %333, %v322
        %v335 = vpop.permute.xlu0 %334
        %338 = vset.pattern.permute.xlu0 0
        %339 = vperm.xlu0 %338, %v323
        %v340 = vpop.permute.xlu0 %339
        %343 = vset.pattern.permute.xlu0 0
        %344 = vperm.xlu0 %343, %v324
        %v345 = vpop.permute.xlu0 %344
        %348 = vset.pattern.permute.xlu0 0
        %349 = vperm.xlu0 %348, %v325
        %v350 = vpop.permute.xlu0 %349
        %353 = vset.pattern.permute.xlu0 0
        %354 = vperm.xlu0 %353, %v326
        %v355 = vpop.permute.xlu0 %354
        %v357 = vadd.f32 %v315, %v330
        %v358 = vadd.f32 %v316, %v335
        %v359 = vadd.f32 %v317, %v340
        %v360 = vadd.f32 %v318, %v345
        %v361 = vadd.f32 %v319, %v350
        %v362 = vadd.f32 %v320, %v355
        %363 = vset.pattern.permute.xlu0 1
        %364 = vperm.xlu0 %363, %v275
        %v365 = vpop.permute.xlu0 %364
        %367 = vset.pattern.permute.xlu0 1
        %368 = vperm.xlu0 %367, %v276
        %v369 = vpop.permute.xlu0 %368
        %371 = vset.pattern.permute.xlu0 1
        %372 = vperm.xlu0 %371, %v277
        %v373 = vpop.permute.xlu0 %372
        %375 = vset.pattern.permute.xlu0 1
        %376 = vperm.xlu0 %375, %v278
        %v377 = vpop.permute.xlu0 %376
        %379 = vset.pattern.permute.xlu0 1
        %380 = vperm.xlu0 %379, %v279
        %v381 = vpop.permute.xlu0 %380
        %383 = vset.pattern.permute.xlu0 1
        %384 = vperm.xlu0 %383, %v280
        %v385 = vpop.permute.xlu0 %384
        %v387 = vlaneseq
        %v388 = vshrl.u32 %v387, 7
        %v389 = vsub.s32 1, %v388
        %v390 = vrot.slane %v274, %v389
        %v391 = vmul.f32 %v365, %v390
        %v392 = vmul.f32 %v369, %v390
        %v393 = vmul.f32 %v373, %v390
        %v394 = vmul.f32 %v377, %v390
        %v395 = vmul.f32 %v381, %v390
        %v396 = vmul.f32 %v385, %v390
        %v397 = vadd.f32 %v357, %v391
        %v398 = vadd.f32 %v358, %v392
        %v399 = vadd.f32 %v359, %v393
        %v400 = vadd.f32 %v360, %v394
        %v401 = vadd.f32 %v361, %v395
        %v402 = vadd.f32 %v362, %v396
        %403 = vset.pattern.permute.xlu0 2
        %404 = vperm.xlu0 %403, %v275
        %v405 = vpop.permute.xlu0 %404
        %407 = vset.pattern.permute.xlu0 2
        %408 = vperm.xlu0 %407, %v276
        %v409 = vpop.permute.xlu0 %408
        %411 = vset.pattern.permute.xlu0 2
        %412 = vperm.xlu0 %411, %v277
        %v413 = vpop.permute.xlu0 %412
        %415 = vset.pattern.permute.xlu0 2
        %416 = vperm.xlu0 %415, %v278
        %v417 = vpop.permute.xlu0 %416
        %419 = vset.pattern.permute.xlu0 2
        %420 = vperm.xlu0 %419, %v279
        %v421 = vpop.permute.xlu0 %420
        %423 = vset.pattern.permute.xlu0 2
        %424 = vperm.xlu0 %423, %v280
        %v425 = vpop.permute.xlu0 %424
        %v427 = vlaneseq
        %v428 = vshrl.u32 %v427, 7
        %v429 = vsub.s32 2, %v428
        %v430 = vrot.slane %v274, %v429
        %v431 = vmul.f32 %v405, %v430
        %v432 = vmul.f32 %v409, %v430
        %v433 = vmul.f32 %v413, %v430
        %v434 = vmul.f32 %v417, %v430
        %v435 = vmul.f32 %v421, %v430
        %v436 = vmul.f32 %v425, %v430
        %v437 = vadd.f32 %v397, %v431
        %v438 = vadd.f32 %v398, %v432
        %v439 = vadd.f32 %v399, %v433
        %v440 = vadd.f32 %v400, %v434
        %v441 = vadd.f32 %v401, %v435
        %v442 = vadd.f32 %v402, %v436
        %v443 = vtanh.pop %v437
        %v444 = vtanh.pop %v438
        %v445 = vtanh.pop %v439
        %v446 = vtanh.pop %v440
        %v447 = vtanh.pop %v441
        %v448 = vtanh.pop %v442
        %v449 = vld [vmem:[%s3] sm:$0xff]
        %v450 = vld [vmem:[%s3 + $0x8] sm:$0xff]
        %v451 = vld [vmem:[%s3 + $0x10] sm:$0xff]
        %v452 = vld [vmem:[%s3 + $0x18] sm:$0xff]
        %v453 = vld [vmem:[%s3 + $0x20] sm:$0xff]
        %v454 = vld [vmem:[%s3 + $0x28] sm:$0xff]
        %v455 = vld [vmem:[%s4] sm:$0xff]
        %v456 = vld [vmem:[%s4 + $0x8] sm:$0xff]
        %v457 = vld [vmem:[%s4 + $0x10] sm:$0xff]
        %v458 = vld [vmem:[%s4 + $0x18] sm:$0xff]
        %v459 = vld [vmem:[%s4 + $0x20] sm:$0xff]
        %v460 = vld [vmem:[%s4 + $0x28] sm:$0xff]
        %462 = vset.pattern.permute.xlu0 0
        %463 = vperm.xlu0 %462, %v455
        %v464 = vpop.permute.xlu0 %463
        %467 = vset.pattern.permute.xlu0 0
        %468 = vperm.xlu0 %467, %v456
        %v469 = vpop.permute.xlu0 %468
        %472 = vset.pattern.permute.xlu0 0
        %473 = vperm.xlu0 %472, %v457
        %v474 = vpop.permute.xlu0 %473
        %477 = vset.pattern.permute.xlu0 0
        %478 = vperm.xlu0 %477, %v458
        %v479 = vpop.permute.xlu0 %478
        %482 = vset.pattern.permute.xlu0 0
        %483 = vperm.xlu0 %482, %v459
        %v484 = vpop.permute.xlu0 %483
        %487 = vset.pattern.permute.xlu0 0
        %488 = vperm.xlu0 %487, %v460
        %v489 = vpop.permute.xlu0 %488
        %vm491 = vcmask 392192
        %v493 = vsel %vm491, %v449, 0
        %v496 = vsel %vm491, %v450, 0
        %v499 = vsel %vm491, %v451, 0
        %v502 = vsel %vm491, %v452, 0
        %v505 = vsel %vm491, %v453, 0
        %v508 = vsel %vm491, %v454, 0
        %510 = vmatprep.subr.mxu0 0.0
        %511 = vmatpush1.msra.mxu0 0.0
        %512 = vmatprep.subr.mxu0 0.0
        %513 = vmatpush1.msra.mxu0 0.0
        %514 = vmatprep.subr.mxu0 0.0
        %515 = vmatpush1.msra.mxu0 0.0
        %516 = vmatprep.subr.mxu0 0.0
        %517 = vmatpush1.msra.mxu0 0.0
        %518 = vmatprep.subr.mxu0 0.0
        %519 = vmatpush1.msra.mxu0 0.0
        %520 = vmatprep.subr.mxu0 0.0
        %521 = vmatpush1.msra.mxu0 0.0
        %522 = vmatprep.subr.mxu0 0.0
        %523 = vmatpush1.msra.mxu0 0.0
        %524 = vmatprep.subr.mxu0 0.0
        %525 = vmatpush1.msra.mxu0 0.0
        %526 = vmatprep.subr.mxu0 0.0
        %527 = vmatpush1.msra.mxu0 0.0
        %528 = vmatprep.subr.mxu0 0.0
        %529 = vmatpush1.msra.mxu0 0.0
        %530 = vmatprep.subr.mxu0 0.0
        %531 = vmatpush1.msra.mxu0 %v448
        %532 = vmatprep.subr.mxu0 0.0
        %533 = vmatpush1.msra.mxu0 %v447
        %534 = vmatprep.subr.mxu0 0.0
        %535 = vmatpush1.msra.mxu0 %v446
        %536 = vmatprep.subr.mxu0 0.0
        %537 = vmatpush1.msra.mxu0 %v445
        %538 = vmatprep.subr.mxu0 0.0
        %539 = vmatpush1.msra.mxu0 %v444
        %540 = vmatprep.subr.mxu0 0.0
        %541 = vmatpush1.msra.mxu0 %v443
        %542 = vmatprep.subr.mxu0 0.0
        %543 = vmatpush2.msra.mxu0 0.0
        %544 = vmatprep.subr.mxu0 0.0
        %545 = vmatpush2.msra.mxu0 0.0
        %546 = vmatprep.subr.mxu0 0.0
        %547 = vmatpush2.msra.mxu0 0.0
        %548 = vmatprep.subr.mxu0 0.0
        %549 = vmatpush2.msra.mxu0 0.0
        %550 = vmatprep.subr.mxu0 0.0
        %551 = vmatpush2.msra.mxu0 0.0
        %552 = vmatprep.subr.mxu0 0.0
        %553 = vmatpush2.msra.mxu0 0.0
        %554 = vmatprep.subr.mxu0 0.0
        %555 = vmatpush2.msra.mxu0 0.0
        %556 = vmatprep.subr.mxu0 0.0
        %557 = vmatpush2.msra.mxu0 0.0
        %558 = vmatprep.subr.mxu0 0.0
        %559 = vmatpush2.msra.mxu0 0.0
        %560 = vmatprep.subr.mxu0 0.0
        %561 = vmatpush2.msra.mxu0 0.0
        %562 = vmatprep.subr.mxu0 0.0
        %563 = vmatpush2.msra.mxu0 0.0
        %564 = vmatprep.subr.mxu0 0.0
        %565 = vmatpush2.msra.mxu0 0.0
        %566 = vmatprep.subr.mxu0 0.0
        %567 = vmatpush2.msra.mxu0 0.0
        %568 = vmatprep.subr.mxu0 0.0
        %569 = vmatpush2.msra.mxu0 0.0
        %570 = vmatprep.subr.mxu0 0.0
        %571 = vmatpush2.msra.mxu0 0.0
        %572 = vmatprep.subr.mxu0 0.0
        %573 = vmatpush2.msra.mxu0 0.0
        %574 = vmatprep.mubr.f32.mxu0 0.0
        %575 = vmatmul.mubr.f32.gmra.mxu0 %v493
        %v576 = vpop.f32.mrf.mxu0
        %v577 = vadd.f32 %v464, %v576
        %v578 = vpop.f32.mrf.mxu0
        %579 = vmatprep.mubr.f32.mxu0 0.0
        %580 = vmatmul.mubr.f32.gmra.mxu0 %v496
        %v581 = vpop.f32.mrf.mxu0
        %v582 = vadd.f32 %v469, %v581
        %v583 = vpop.f32.mrf.mxu0
        %584 = vmatprep.mubr.f32.mxu0 0.0
        %585 = vmatmul.mubr.f32.gmra.mxu0 %v499
        %v586 = vpop.f32.mrf.mxu0
        %v587 = vadd.f32 %v474, %v586
        %v588 = vpop.f32.mrf.mxu0
        %589 = vmatprep.mubr.f32.mxu0 0.0
        %590 = vmatmul.mubr.f32.gmra.mxu0 %v502
        %v591 = vpop.f32.mrf.mxu0
        %v592 = vadd.f32 %v479, %v591
        %v593 = vpop.f32.mrf.mxu0
        %594 = vmatprep.mubr.f32.mxu0 0.0
        %595 = vmatmul.mubr.f32.gmra.mxu0 %v505
        %v596 = vpop.f32.mrf.mxu0
        %v597 = vadd.f32 %v484, %v596
        %v598 = vpop.f32.mrf.mxu0
        %599 = vmatprep.mubr.f32.mxu0 0.0
        %600 = vmatmul.mubr.f32.gmra.mxu0 %v508
        %v601 = vpop.f32.mrf.mxu0
        %v602 = vadd.f32 %v489, %v601
        %v603 = vpop.f32.mrf.mxu0
        %604 = vdwg.mxu0
        %v605 = vtanh.pop %v577
        %v606 = vtanh.pop %v582
        %v607 = vtanh.pop %v587
        %v608 = vtanh.pop %v592
        %v609 = vtanh.pop %v597
        %v610 = vtanh.pop %v602
        %v611 = vld [vmem:[%s5] sm:$0xf]
        %v612 = vld [vmem:[%s6] sm:$0xf]
        %614 = vset.pattern.permute.xlu0 0
        %615 = vperm.xlu0 %614, %v612
        %v616 = vpop.permute.xlu0 %615
        %v619 = vsel %vm491, %v611, 0
        %621 = vmatprep.subr.mxu0 0.0
        %622 = vmatpush1.msra.mxu0 0.0
        %623 = vmatprep.subr.mxu0 0.0
        %624 = vmatpush1.msra.mxu0 0.0
        %625 = vmatprep.subr.mxu0 0.0
        %626 = vmatpush1.msra.mxu0 0.0
        %627 = vmatprep.subr.mxu0 0.0
        %628 = vmatpush1.msra.mxu0 0.0
        %629 = vmatprep.subr.mxu0 0.0
        %630 = vmatpush1.msra.mxu0 0.0
        %631 = vmatprep.subr.mxu0 0.0
        %632 = vmatpush1.msra.mxu0 0.0
        %633 = vmatprep.subr.mxu0 0.0
        %634 = vmatpush1.msra.mxu0 0.0
        %635 = vmatprep.subr.mxu0 0.0
        %636 = vmatpush1.msra.mxu0 0.0
        %637 = vmatprep.subr.mxu0 0.0
        %638 = vmatpush1.msra.mxu0 0.0
        %639 = vmatprep.subr.mxu0 0.0
        %640 = vmatpush1.msra.mxu0 0.0
        %641 = vmatprep.subr.mxu0 0.0
        %642 = vmatpush1.msra.mxu0 %v610
        %643 = vmatprep.subr.mxu0 0.0
        %644 = vmatpush1.msra.mxu0 %v609
        %645 = vmatprep.subr.mxu0 0.0
        %646 = vmatpush1.msra.mxu0 %v608
        %647 = vmatprep.subr.mxu0 0.0
        %648 = vmatpush1.msra.mxu0 %v607
        %649 = vmatprep.subr.mxu0 0.0
        %650 = vmatpush1.msra.mxu0 %v606
        %651 = vmatprep.subr.mxu0 0.0
        %652 = vmatpush1.msra.mxu0 %v605
        %653 = vmatprep.subr.mxu0 0.0
        %654 = vmatpush2.msra.mxu0 0.0
        %655 = vmatprep.subr.mxu0 0.0
        %656 = vmatpush2.msra.mxu0 0.0
        %657 = vmatprep.subr.mxu0 0.0
        %658 = vmatpush2.msra.mxu0 0.0
        %659 = vmatprep.subr.mxu0 0.0
        %660 = vmatpush2.msra.mxu0 0.0
        %661 = vmatprep.subr.mxu0 0.0
        %662 = vmatpush2.msra.mxu0 0.0
        %663 = vmatprep.subr.mxu0 0.0
        %664 = vmatpush2.msra.mxu0 0.0
        %665 = vmatprep.subr.mxu0 0.0
        %666 = vmatpush2.msra.mxu0 0.0
        %667 = vmatprep.subr.mxu0 0.0
        %668 = vmatpush2.msra.mxu0 0.0
        %669 = vmatprep.subr.mxu0 0.0
        %670 = vmatpush2.msra.mxu0 0.0
        %671 = vmatprep.subr.mxu0 0.0
        %672 = vmatpush2.msra.mxu0 0.0
        %673 = vmatprep.subr.mxu0 0.0
        %674 = vmatpush2.msra.mxu0 0.0
        %675 = vmatprep.subr.mxu0 0.0
        %676 = vmatpush2.msra.mxu0 0.0
        %677 = vmatprep.subr.mxu0 0.0
        %678 = vmatpush2.msra.mxu0 0.0
        %679 = vmatprep.subr.mxu0 0.0
        %680 = vmatpush2.msra.mxu0 0.0
        %681 = vmatprep.subr.mxu0 0.0
        %682 = vmatpush2.msra.mxu0 0.0
        %683 = vmatprep.subr.mxu0 0.0
        %684 = vmatpush2.msra.mxu0 0.0
        %685 = vmatprep.mubr.f32.mxu0 0.0
        %686 = vmatmul.mubr.f32.gmra.mxu0 %v619
        %v687 = vpop.f32.mrf.mxu0
        %v688 = vadd.f32 %v616, %v687
        %v689 = vpop.f32.mrf.mxu0
        %690 = vdwg.mxu0
        %691 = vst [vmem:[%s269] sm:$0xf] %v688
        %s692 = sand.u32 %s181, 1
        %s693 = scalar_lea.sflag [#allocation3], %s692
        %s694 = sand.u32 %s181, 1
        %s695 = smul.addr %s694, 4
        %s696 = scalar_lea.vmem [#allocation2], %s695
        // Predicated region
        $region49: #{tpu_custom_call.1} parent=47 // pred_check
          %p697 = pneg %p191
        $region50: #{tpu_custom_call.1} parent=47 // pred_check_branch
          %699 = sbr.rel (%p697) target = $region52
        $region51: #{tpu_custom_call.1} parent=47 // pred_region
          %s701 = ssub.s32 64, 64
          %702 = vsyncadd %s693, %s701
          %s703 = smul.addr %s21, 64
          %s704 = scalar_lea.hbm %s7, %s703
          %s706 = sshll.u32 %s696, 4
          %s707 = int_to_ptr.vmem [resolvable:$true] %s706
          %709 = dma.vmem_to_hbm [thread:$0]  %s707, 64, %s704, %s693
        $region52: #{tpu_custom_call.1} parent=47 // pred_fallthru
          _
      $region48: #{tpu_custom_call.1} parent=5 // pred_fallthru
        _
      %p710 = scmp.le.s32.totalorder 2, %s16
      // Predicated region
      $region53: #{tpu_custom_call.1} parent=5 // pred_check
        %p711 = pneg %p710
      $region54: #{tpu_custom_call.1} parent=5 // pred_check_branch
        %713 = sbr.rel (%p711) target = $region56
      $region55: #{tpu_custom_call.1} parent=5 // pred_region
        %s714 = ssub.s32 %s16, 2
        // Predicated region
        $region57: #{tpu_custom_call.1} parent=55 // pred_check
          %p715 = pneg %p197
        $region58: #{tpu_custom_call.1} parent=55 // pred_check_branch
          %717 = sbr.rel (%p715) target = $region60
        $region59: #{tpu_custom_call.1} parent=55 // pred_region
          %s718 = sand.u32 %s182, 1
          %s719 = scalar_lea.sflag [#allocation3], %s718
          %s720 = sand.u32 %s182, 1
          %s721 = smul.addr %s720, 4
          %s722 = scalar_lea.vmem [#allocation2], %s721
          %723 = dma.done %s719, 64
        $region60: #{tpu_custom_call.1} parent=55 // pred_fallthru
          _
      $region56: #{tpu_custom_call.1} parent=5 // pred_fallthru
        _
    $region6: #{tpu_custom_call.1} parent=1 // loop_footer
      %s20 = sadd.s32 1, %s16
    $region7: #{tpu_custom_call.1} parent=1 // loop_footer_branch
      %15 = sbr.rel target = $region3
    $region8: #{tpu_custom_call.1} parent=1 // loop_exit
      _
    %724 = vsyncpa [#allocation3], 1
    %s725 = scalar_lea.sflag [#allocation3], 1
    %726 = vsyncpa %s725, 1

</llo_original>
